<compile_context>
chip_gen: v7x
topology: tpu7x:2x2x1
jax: 0.10.0
libtpu: 0.0.40
codegen_flags: <defaults>
</compile_context>

<pallas_src>
import functools

import jax
import jax.numpy as jnp
from jax.experimental import pallas as pl
from jax.experimental.pallas import tpu as pltpu


def _round_up(n, m):
    return ((n + m - 1) // m) * m


# ----------------------------------------------------------------------------
# Kernel (one batch tile per grid step)
# ----------------------------------------------------------------------------
def dueling_dqn_kernel(x_ref, w_ref, b_ref, out_ref, *,
                       n_actions, batch, compute_dtype):
    """One (TB, Dp) batch tile of the Dueling-DQN MLP.

    x_ref:   (TB, Dp)     zero-padded states (f32)
    w_ref:   (4, Dp, Dp)  packed, zero-padded weights (compute_dtype), resident
                          [0]=fc1  [1]=fc2  [2]=[fc3_adv|fc3_val]
                          [3]=blockdiag(fc4_adv, fc4_val)
    b_ref:   (4, 1, Dp)   packed, zero-padded biases (f32), resident
    out_ref: (TB, Dp)     lane-dense output slab:
                          lanes [0, A)  = val + adv   (mean not yet subtracted)
                          lane  A       = per-row masked adv sum (0 on pad rows)
    """
    cd = compute_dtype

    def dense(h, i):
        # bf16/f32 operands on the MXU, f32 accumulate, f32 bias add.
        return jnp.dot(h.astype(cd), w_ref[i],
                       preferred_element_type=jnp.float32) + b_ref[i]

    h = jnp.maximum(dense(x_ref[...], 0), 0.0)   # fc1 + relu
    h = jnp.maximum(dense(h, 1), 0.0)            # fc2 + relu
    h = jnp.maximum(dense(h, 2), 0.0)            # fused fc3_adv|fc3_val + relu
    z = dense(h, 3)                              # lanes [0:A)=adv, lane A=val

    tb, dp = z.shape
    # Broadcastable masks: (1, Dp) lane iota and (TB, 1) global-row iota.
    lane = jax.lax.broadcasted_iota(jnp.int32, (1, dp), 1)
    rows = (jax.lax.broadcasted_iota(jnp.int32, (tb, 1), 0)
            + pl.program_id(0) * tb)
    row_ok = rows < batch

    # Per-row advantage sum over the REAL action lanes, zeroed on padded rows
    # so the wrapper's global sum never sees bias-propagated garbage.
    adv_row_sum = jnp.sum(jnp.where((lane < n_actions) & row_ok, z, 0.0),
                          axis=-1, keepdims=True)                      # (TB,1)

    # Per-row value column (lane == n_actions) via masked reduce (no 1-lane slice).
    val = jnp.sum(jnp.where(lane == n_actions, z, 0.0),
                  axis=-1, keepdims=True)                              # (TB,1)

    q_pre = val + z
    # Lane-dense store: real q_pre in lanes [0, A), adv row-sum parked at lane A.
    out_ref[...] = jnp.where(lane == n_actions, adv_row_sum, q_pre)


# ----------------------------------------------------------------------------
# Parameter packing — DO THIS ONCE, outside the per-step forward.
# ----------------------------------------------------------------------------
def pack_params(params, *, compute_dtype=jnp.float32, lane=128):
    """Fuse the adv/val heads, zero-pad to a common 128-aligned width Dp and
    collapse everything into two arrays: (4,Dp,Dp) weights + (4,1,Dp) biases.

    Note: the uniform Dp slab keeps the kernel at 3 input DMAs; for strongly
    non-square real layer widths a per-layer padded layout would save
    bandwidth/FLOPs, irrelevant at these sizes.
    """
    n_actions = params["w4a"].shape[1]
    fc3 = params["w3a"].shape[1]

    # Fused layer 3: [fc3_adv | fc3_val]  -> (FC2, 2*FC3)
    w3 = jnp.concatenate([params["w3a"], params["w3v"]], axis=1)
    b3 = jnp.concatenate([params["b3a"], params["b3v"]], axis=1)

    # Fused layer 4: block-diagonal [[w4a, 0], [0, w4v]] -> (2*FC3, A+1)
    w4a, w4v = params["w4a"], params["w4v"]
    top = jnp.concatenate([w4a, jnp.zeros((fc3, 1), w4a.dtype)], axis=1)
    bot = jnp.concatenate([jnp.zeros((fc3, n_actions), w4v.dtype), w4v], axis=1)
    w4 = jnp.concatenate([top, bot], axis=0)
    b4 = jnp.concatenate([params["b4a"], params["b4v"]], axis=1)

    weights = [params["w1"], params["w2"], w3, w4]
    biases = [params["b1"], params["b2"], b3, b4]

    dp = _round_up(max(max(w.shape) for w in weights), lane)
    w_packed = jnp.stack(
        [jnp.pad(w, ((0, dp - w.shape[0]), (0, dp - w.shape[1])))
         for w in weights]).astype(compute_dtype)     # bf16 halves DMA bytes
    b_packed = jnp.stack(
        [jnp.pad(b, ((0, 0), (0, dp - b.shape[1]))) for b in biases]
    ).astype(jnp.float32)                              # bias add stays f32
    return w_packed, b_packed, n_actions


# ----------------------------------------------------------------------------
# Forward (jitted end-to-end: pad + pallas_call + mean finalize + slice fuse)
# ----------------------------------------------------------------------------
@functools.partial(jax.jit, static_argnames=("n_actions", "batch_block"))
def dueling_dqn_forward(x, w_packed, b_packed, *, n_actions, batch_block=256):
    b_real, input_dims = x.shape
    dp = w_packed.shape[-1]
    cd = w_packed.dtype

    # bf16 vregs are (16,128): round batch tiles to 16 rows for bf16, 8 for f32.
    sub = 16 if cd == jnp.bfloat16 else 8
    tb = min(batch_block, _round_up(b_real, sub))
    bp = _round_up(b_real, tb)
    n_blocks = bp // tb

    xp = jnp.pad(x, ((0, bp - b_real), (0, dp - input_dims)))

    # VMEM budget: resident weight/bias slabs (x2 buffers) + double-buffered
    # x/out tiles + margin.  Kept explicit so the same kernel is portable to
    # v5e's 16 MiB default scoped VMEM and v7x's 64 MiB physical VMEM.
    w_bytes = 4 * dp * dp * jnp.dtype(cd).itemsize + 4 * dp * 4
    tile_bytes = tb * dp * 4
    vmem_limit = min(max(2 * w_bytes + 4 * tile_bytes + (8 << 20), 32 << 20),
                     128 << 20)

    kernel = functools.partial(dueling_dqn_kernel,
                               n_actions=n_actions,
                               batch=b_real,
                               compute_dtype=cd)

    slab = pl.pallas_call(
        kernel,
        out_shape=jax.ShapeDtypeStruct((bp, dp), jnp.float32),
        grid_spec=pltpu.PrefetchScalarGridSpec(
            num_scalar_prefetch=0,
            grid=(n_blocks,),
            in_specs=[
                pl.BlockSpec((tb, dp), lambda i: (i, 0)),        # x tile
                pl.BlockSpec((4, dp, dp), lambda i: (0, 0, 0)),  # weights, resident
                pl.BlockSpec((4, 1, dp), lambda i: (0, 0, 0)),   # biases, resident
            ],
            out_specs=pl.BlockSpec((tb, dp), lambda i: (i, 0)),
        ),
        compiler_params=pltpu.CompilerParams(
            dimension_semantics=("parallel",),     # megacore-shardable on v7x
            vmem_limit_bytes=vmem_limit,
        ),
    )(xp, w_packed, b_packed)

    # Finalize (fused by XLA with the slice inside this jit): global scalar
    # mean over the real (batch, n_actions) advantage entries.
    adv_mean = jnp.sum(slab[:b_real, n_actions]) / (b_real * n_actions)
    return slab[:b_real, :n_actions] - adv_mean


# ----------------------------------------------------------------------------
# Init + pure-JAX reference
# ----------------------------------------------------------------------------
def init_params(key, input_dims, fc1_dim, fc2_dim, fc3_dim, n_actions):
    """Deterministic synthetic init (shapes match nn.Linear layers, transposed)."""
    def linear(k, fan_in, fan_out):
        kw, kb = jax.random.split(k)
        bound = 1.0 / jnp.sqrt(fan_in)
        w = jax.random.uniform(kw, (fan_in, fan_out), jnp.float32, -bound, bound)
        b = jax.random.uniform(kb, (1, fan_out), jnp.float32, -bound, bound)
        return w, b

    keys = jax.random.split(key, 6)
    w1, b1 = linear(keys[0], input_dims, fc1_dim)
    w2, b2 = linear(keys[1], fc1_dim, fc2_dim)
    w3a, b3a = linear(keys[2], fc2_dim, fc3_dim)
    w3v, b3v = linear(keys[3], fc2_dim, fc3_dim)
    w4a, b4a = linear(keys[4], fc3_dim, n_actions)
    w4v, b4v = linear(keys[5], fc3_dim, 1)
    return dict(w1=w1, b1=b1, w2=w2, b2=b2,
                w3a=w3a, b3a=b3a, w3v=w3v, b3v=b3v,
                w4a=w4a, b4a=b4a, w4v=w4v, b4v=b4v)


def reference_forward(x, p):
    relu = lambda v: jnp.maximum(v, 0.0)
    h1 = relu(x @ p["w1"] + p["b1"])
    h2 = relu(h1 @ p["w2"] + p["b2"])
    adv = relu(h2 @ p["w3a"] + p["b3a"]) @ p["w4a"] + p["b4a"]
    val = relu(h2 @ p["w3v"] + p["b3v"]) @ p["w4v"] + p["b4v"]
    return val + (adv - jnp.mean(adv))


if __name__ == "__main__":
    # Small shapes consistent with the module's forward.
    B, INPUT_DIMS = 8, 16
    FC1, FC2, FC3, N_ACTIONS = 32, 32, 32, 8

    key = jax.random.PRNGKey(0)
    k_x, k_p = jax.random.split(key)
    x = jax.random.normal(k_x, (B, INPUT_DIMS), jnp.float32)
    params = init_params(k_p, INPUT_DIMS, FC1, FC2, FC3, N_ACTIONS)

    q_ref = reference_forward(x, params)

    # Pack ONCE (hoisted out of the forward path, per perf review).
    w32, b32, n_act = pack_params(params, compute_dtype=jnp.float32)
    q32 = jax.block_until_ready(
        dueling_dqn_forward(x, w32, b32, n_actions=n_act))
    assert q32.shape == (B, N_ACTIONS)
    assert jnp.allclose(q32, q_ref, atol=1e-5, rtol=1e-5)

    # bf16 operand path (native MXU rate on v5e/v6e/v7x); loose tolerance.
    wbf, bbf, _ = pack_params(params, compute_dtype=jnp.bfloat16)
    qbf = jax.block_until_ready(
        dueling_dqn_forward(x, wbf, bbf, n_actions=n_act))
    assert qbf.shape == (B, N_ACTIONS)
    assert jnp.allclose(qbf, q_ref, atol=1e-1, rtol=1e-1)

    # TODO(synk): Adam optimizer / MSELoss / checkpoint save-load from the
    # PyTorch class are training/IO concerns, not part of the forward pass.
    print("KERNEL_OK")
</pallas_src>

<mosaic_0001>
module attributes {stable_mosaic.version = 11 : i64} {
  func.func @dueling_dqn_kernel(%arg0: i32, %arg1: memref<8x128xf32, #tpu.memory_space<vmem>>, %arg2: memref<4x128x128xf32, #tpu.memory_space<vmem>>, %arg3: memref<4x1x128xf32, #tpu.memory_space<vmem>>, %arg4: memref<8x128xf32, #tpu.memory_space<vmem>>) attributes {dimension_semantics = [#tpu.dimension_semantics<parallel>], iteration_bounds = array<i64: 1>, scalar_prefetch = 0 : i64, scratch_operands = 0 : i64, tpu.core_type = #tpu.core_type<tc>, window_params = [{transform_indices = @transform_0, window_bounds = array<i64: 8, 128>}, {pipeline_mode = #tpu.pipeline_mode<synchronous>, transform_indices = @transform_1, window_bounds = array<i64: 4, 128, 128>}, {pipeline_mode = #tpu.pipeline_mode<synchronous>, transform_indices = @transform_2, window_bounds = array<i64: 4, 1, 128>}, {transform_indices = @transform_3, window_bounds = array<i64: 8, 128>}]} {
    %c0 = arith.constant 0 : index
    %c0_0 = arith.constant 0 : index
    %0 = vector.load %arg1[%c0, %c0_0] : memref<8x128xf32, #tpu.memory_space<vmem>>, vector<8x128xf32>
    %c0_1 = arith.constant 0 : index
    %c0_2 = arith.constant 0 : index
    %c0_3 = arith.constant 0 : index
    %1 = vector.load %arg2[%c0_1, %c0_2, %c0_3] : memref<4x128x128xf32, #tpu.memory_space<vmem>>, vector<1x128x128xf32>
    %2 = vector.shape_cast %1 : vector<1x128x128xf32> to vector<128x128xf32>
    %cst = arith.constant dense<0.000000e+00> : vector<8x128xf32>
    %3 = tpu.matmul %0, %2, %cst {dimension_numbers = #tpu.dot_dimension_numbers<[1], [0], [0], [1], [0, 0, 1, 1], [], []>} : vector<8x128xf32>, vector<128x128xf32>, vector<8x128xf32> -> vector<8x128xf32>
    %c0_4 = arith.constant 0 : index
    %c0_5 = arith.constant 0 : index
    %c0_6 = arith.constant 0 : index
    %4 = vector.load %arg3[%c0_4, %c0_5, %c0_6] : memref<4x1x128xf32, #tpu.memory_space<vmem>>, vector<1x1x128xf32>
    %5 = vector.shape_cast %4 : vector<1x1x128xf32> to vector<1x128xf32>
    %6 = vector.broadcast %5 : vector<1x128xf32> to vector<8x128xf32>
    %7 = arith.addf %3, %6 : vector<8x128xf32>
    %cst_7 = arith.constant 0.000000e+00 : f32
    %8 = vector.broadcast %cst_7 : f32 to vector<8x128xf32>
    %9 = arith.maximumf %7, %8 : vector<8x128xf32>
    %c1 = arith.constant 1 : index
    %c0_8 = arith.constant 0 : index
    %c0_9 = arith.constant 0 : index
    %10 = vector.load %arg2[%c1, %c0_8, %c0_9] : memref<4x128x128xf32, #tpu.memory_space<vmem>>, vector<1x128x128xf32>
    %11 = vector.shape_cast %10 : vector<1x128x128xf32> to vector<128x128xf32>
    %cst_10 = arith.constant dense<0.000000e+00> : vector<8x128xf32>
    %12 = tpu.matmul %9, %11, %cst_10 {dimension_numbers = #tpu.dot_dimension_numbers<[1], [0], [0], [1], [0, 0, 1, 1], [], []>} : vector<8x128xf32>, vector<128x128xf32>, vector<8x128xf32> -> vector<8x128xf32>
    %c1_11 = arith.constant 1 : index
    %c0_12 = arith.constant 0 : index
    %c0_13 = arith.constant 0 : index
    %13 = vector.load %arg3[%c1_11, %c0_12, %c0_13] : memref<4x1x128xf32, #tpu.memory_space<vmem>>, vector<1x1x128xf32>
    %14 = vector.shape_cast %13 : vector<1x1x128xf32> to vector<1x128xf32>
    %15 = vector.broadcast %14 : vector<1x128xf32> to vector<8x128xf32>
    %16 = arith.addf %12, %15 : vector<8x128xf32>
    %cst_14 = arith.constant 0.000000e+00 : f32
    %17 = vector.broadcast %cst_14 : f32 to vector<8x128xf32>
    %18 = arith.maximumf %16, %17 : vector<8x128xf32>
    %c2 = arith.constant 2 : index
    %c0_15 = arith.constant 0 : index
    %c0_16 = arith.constant 0 : index
    %19 = vector.load %arg2[%c2, %c0_15, %c0_16] : memref<4x128x128xf32, #tpu.memory_space<vmem>>, vector<1x128x128xf32>
    %20 = vector.shape_cast %19 : vector<1x128x128xf32> to vector<128x128xf32>
    %cst_17 = arith.constant dense<0.000000e+00> : vector<8x128xf32>
    %21 = tpu.matmul %18, %20, %cst_17 {dimension_numbers = #tpu.dot_dimension_numbers<[1], [0], [0], [1], [0, 0, 1, 1], [], []>} : vector<8x128xf32>, vector<128x128xf32>, vector<8x128xf32> -> vector<8x128xf32>
    %c2_18 = arith.constant 2 : index
    %c0_19 = arith.constant 0 : index
    %c0_20 = arith.constant 0 : index
    %22 = vector.load %arg3[%c2_18, %c0_19, %c0_20] : memref<4x1x128xf32, #tpu.memory_space<vmem>>, vector<1x1x128xf32>
    %23 = vector.shape_cast %22 : vector<1x1x128xf32> to vector<1x128xf32>
    %24 = vector.broadcast %23 : vector<1x128xf32> to vector<8x128xf32>
    %25 = arith.addf %21, %24 : vector<8x128xf32>
    %cst_21 = arith.constant 0.000000e+00 : f32
    %26 = vector.broadcast %cst_21 : f32 to vector<8x128xf32>
    %27 = arith.maximumf %25, %26 : vector<8x128xf32>
    %c3 = arith.constant 3 : index
    %c0_22 = arith.constant 0 : index
    %c0_23 = arith.constant 0 : index
    %28 = vector.load %arg2[%c3, %c0_22, %c0_23] : memref<4x128x128xf32, #tpu.memory_space<vmem>>, vector<1x128x128xf32>
    %29 = vector.shape_cast %28 : vector<1x128x128xf32> to vector<128x128xf32>
    %cst_24 = arith.constant dense<0.000000e+00> : vector<8x128xf32>
    %30 = tpu.matmul %27, %29, %cst_24 {dimension_numbers = #tpu.dot_dimension_numbers<[1], [0], [0], [1], [0, 0, 1, 1], [], []>} : vector<8x128xf32>, vector<128x128xf32>, vector<8x128xf32> -> vector<8x128xf32>
    %c3_25 = arith.constant 3 : index
    %c0_26 = arith.constant 0 : index
    %c0_27 = arith.constant 0 : index
    %31 = vector.load %arg3[%c3_25, %c0_26, %c0_27] : memref<4x1x128xf32, #tpu.memory_space<vmem>>, vector<1x1x128xf32>
    %32 = vector.shape_cast %31 : vector<1x1x128xf32> to vector<1x128xf32>
    %33 = vector.broadcast %32 : vector<1x128xf32> to vector<8x128xf32>
    %34 = arith.addf %30, %33 : vector<8x128xf32>
    %35 = tpu.iota {dimensions = array<i32: 1>} : vector<1x128xi32>
    %36 = tpu.iota {dimensions = array<i32: 0>} : vector<8x1xi32>
    %c8_i32 = arith.constant 8 : i32
    %37 = arith.muli %arg0, %c8_i32 : i32
    %38 = vector.broadcast %37 : i32 to vector<8x1xi32>
    %39 = arith.addi %36, %38 : vector<8x1xi32>
    %c8_i32_28 = arith.constant 8 : i32
    %40 = vector.broadcast %c8_i32_28 : i32 to vector<8x1xi32>
    %41 = arith.cmpi slt, %39, %40 : vector<8x1xi32>
    %c8_i32_29 = arith.constant 8 : i32
    %42 = vector.broadcast %c8_i32_29 : i32 to vector<1x128xi32>
    %43 = arith.cmpi slt, %35, %42 : vector<1x128xi32>
    %44 = vector.broadcast %43 : vector<1x128xi1> to vector<8x128xi1>
    %45 = vector.broadcast %41 : vector<8x1xi1> to vector<8x128xi1>
    %46 = arith.andi %44, %45 : vector<8x128xi1>
    %cst_30 = arith.constant 0.000000e+00 : f32
    %47 = vector.broadcast %cst_30 : f32 to vector<8x128xf32>
    %48 = arith.select %46, %34, %47 : vector<8x128xi1>, vector<8x128xf32>
    %cst_31 = arith.constant dense<0.000000e+00> : vector<8xf32>
    %49 = vector.multi_reduction <add>, %48, %cst_31 [1] : vector<8x128xf32> to vector<8xf32>
    %50 = vector.shape_cast %49 : vector<8xf32> to vector<8x1xf32>
    %c8_i32_32 = arith.constant 8 : i32
    %51 = vector.broadcast %c8_i32_32 : i32 to vector<1x128xi32>
    %52 = arith.cmpi eq, %35, %51 : vector<1x128xi32>
    %cst_33 = arith.constant 0.000000e+00 : f32
    %53 = vector.shape_cast %52 : vector<1x128xi1> to vector<1x128xi1>
    %54 = vector.broadcast %53 : vector<1x128xi1> to vector<8x128xi1>
    %55 = vector.broadcast %cst_33 : f32 to vector<8x128xf32>
    %56 = arith.select %54, %34, %55 : vector<8x128xi1>, vector<8x128xf32>
    %cst_34 = arith.constant dense<0.000000e+00> : vector<8xf32>
    %57 = vector.multi_reduction <add>, %56, %cst_34 [1] : vector<8x128xf32> to vector<8xf32>
    %58 = vector.shape_cast %57 : vector<8xf32> to vector<8x1xf32>
    %59 = vector.broadcast %58 : vector<8x1xf32> to vector<8x128xf32>
    %60 = arith.addf %59, %34 : vector<8x128xf32>
    %c8_i32_35 = arith.constant 8 : i32
    %61 = vector.broadcast %c8_i32_35 : i32 to vector<1x128xi32>
    %62 = arith.cmpi eq, %35, %61 : vector<1x128xi32>
    %63 = vector.shape_cast %62 : vector<1x128xi1> to vector<1x128xi1>
    %64 = vector.broadcast %63 : vector<1x128xi1> to vector<8x128xi1>
    %65 = vector.shape_cast %50 : vector<8x1xf32> to vector<8x1xf32>
    %66 = vector.broadcast %65 : vector<8x1xf32> to vector<8x128xf32>
    %67 = arith.select %64, %66, %60 : vector<8x128xi1>, vector<8x128xf32>
    %c0_36 = arith.constant 0 : index
    %c0_37 = arith.constant 0 : index
    %68 = vector.load %arg4[%c0_36, %c0_37] : memref<8x128xf32, #tpu.memory_space<vmem>>, vector<8x128xf32>
    tpu.vector_store %arg4[%c0_36, %c0_37], %67 {strides = array<i32>} : memref<8x128xf32, #tpu.memory_space<vmem>>, vector<8x128xf32>,
    return
  }
  func.func @transform_0(%arg0: i32) -> (i32, i32) {
    %c0_i32 = arith.constant 0 : i32
    %c0_i32_0 = arith.constant 0 : i32
    return %arg0, %c0_i32 : i32, i32
  }
  func.func @transform_1(%arg0: i32) -> (i32, i32, i32) {
    %c0_i32 = arith.constant 0 : i32
    %c0_i32_0 = arith.constant 0 : i32
    %c0_i32_1 = arith.constant 0 : i32
    %c0_i32_2 = arith.constant 0 : i32
    return %c0_i32, %c0_i32_0, %c0_i32_1 : i32, i32, i32
  }
  func.func @transform_2(%arg0: i32) -> (i32, i32, i32) {
    %c0_i32 = arith.constant 0 : i32
    %c0_i32_0 = arith.constant 0 : i32
    %c0_i32_1 = arith.constant 0 : i32
    %c0_i32_2 = arith.constant 0 : i32
    return %c0_i32, %c0_i32_0, %c0_i32_1 : i32, i32, i32
  }
  func.func @transform_3(%arg0: i32) -> (i32, i32) {
    %c0_i32 = arith.constant 0 : i32
    %c0_i32_0 = arith.constant 0 : i32
    return %arg0, %c0_i32 : i32, i32
  }
}

</mosaic_0001>

<llo_original>
// kernel: dueling_dqn_forward.1
$region0: #{dueling_dqn_forward.1}
  #allocation0 [shape = 'u32[]', space=smem, size = 0x4, offset = 0x4, fixed_abs, tag = 'smem constant byte address 0x4 - core index']
  #allocation1 [shape = 'u32[144,128]{1,0:T(1,128)}', space=vmem, size = 0x12000, scoped, tag = 'internal scratch']
  %s0 = inlined_call_operand.vmem [shape: f32[8,128], index: 0, kind: input, shape index: {}]
  %s1 = inlined_call_operand.hbm [shape: f32[4,128,128], index: 1, kind: input, shape index: {}]
  %s2 = inlined_call_operand.vmem [shape: f32[4,1,128], index: 2, kind: input, shape index: {}]
  %s3 = inlined_call_operand.vmem [shape: f32[8,128], index: 3, kind: output, shape index: {}]
  %s4 = sld [smem:[#allocation0]]
  $region26: #{dueling_dqn_forward.1} parent=0
    _
  %s6 = ssub.s32 1, %s4
  %s7 = scalar_select 0, %s6, %s4
  $region1: #{dueling_dqn_forward.1} parent=0
    #allocation2 [shape = 'u8[262144]{0}', space=vmem, size = 0x40000, scoped, tag = 'input window, operand 1, single buffered']
    #allocation3 [shape = 's32[1]{0}', space=sflag, size = 0x4, scoped, tag = 'scoped memory for dueling_dqn_forward.1']
    %8 = vsyncpa [#allocation3], 0
    // Predicated region
    $region2: #{dueling_dqn_forward.1} parent=1 // pred_check
      _
    $region3: #{dueling_dqn_forward.1} parent=1 // pred_check_branch
      %10 = sbr.rel (0) target = $region5
    $region4: #{dueling_dqn_forward.1} parent=1 // pred_region
      _
    $region5: #{dueling_dqn_forward.1} parent=1 // pred_fallthru
      _
    // Predicated region
    $region6: #{dueling_dqn_forward.1} parent=1 // pred_check
      _
    $region7: #{dueling_dqn_forward.1} parent=1 // pred_check_branch
      %12 = sbr.rel (0) target = $region9
    $region8: #{dueling_dqn_forward.1} parent=1 // pred_region
      %s14 = ssub.s32 8192, 8192
      %15 = vsyncadd [#allocation3], %s14
      %s16 = sshll.u32 [#allocation2], 4
      %s17 = int_to_ptr.vmem [resolvable:$true] %s16
      %22 = dma.hbm_to_vmem [thread:$0]  %s1, 8192, %s17, [#allocation3], 128, 128, 8
    $region9: #{dueling_dqn_forward.1} parent=1 // pred_fallthru
      _
    // Predicated region
    $region10: #{dueling_dqn_forward.1} parent=1 // pred_check
      _
    $region11: #{dueling_dqn_forward.1} parent=1 // pred_check_branch
      %24 = sbr.rel (0) target = $region13
    $region12: #{dueling_dqn_forward.1} parent=1 // pred_region
      _
    $region13: #{dueling_dqn_forward.1} parent=1 // pred_fallthru
      _
    // Predicated region
    $region14: #{dueling_dqn_forward.1} parent=1 // pred_check
      _
    $region15: #{dueling_dqn_forward.1} parent=1 // pred_check_branch
      %26 = sbr.rel (0) target = $region17
    $region16: #{dueling_dqn_forward.1} parent=1 // pred_region
      %27 = dma.done [#allocation3], 8192
    $region17: #{dueling_dqn_forward.1} parent=1 // pred_fallthru
      _
    %v28 = vld [vmem:[%s0] sm:$0xff]
    %v29 = vld [vmem:[#allocation2] sm:$0xff]
    %v30 = vld [vmem:[#allocation2 + $0x8] sm:$0xff]
    %v31 = vld [vmem:[#allocation2 + $0x10] sm:$0xff]
    %v32 = vld [vmem:[#allocation2 + $0x18] sm:$0xff]
    %v33 = vld [vmem:[#allocation2 + $0x20] sm:$0xff]
    %v34 = vld [vmem:[#allocation2 + $0x28] sm:$0xff]
    %v35 = vld [vmem:[#allocation2 + $0x30] sm:$0xff]
    %v36 = vld [vmem:[#allocation2 + $0x38] sm:$0xff]
    %v37 = vld [vmem:[#allocation2 + $0x40] sm:$0xff]
    %v38 = vld [vmem:[#allocation2 + $0x48] sm:$0xff]
    %v39 = vld [vmem:[#allocation2 + $0x50] sm:$0xff]
    %v40 = vld [vmem:[#allocation2 + $0x58] sm:$0xff]
    %v41 = vld [vmem:[#allocation2 + $0x60] sm:$0xff]
    %v42 = vld [vmem:[#allocation2 + $0x68] sm:$0xff]
    %v43 = vld [vmem:[#allocation2 + $0x70] sm:$0xff]
    %v44 = vld [vmem:[#allocation2 + $0x78] sm:$0xff]
    %v45 = vld [vmem:[%s2] sm:$0x1]
    %v47 = vlaneseq
    %v48 = vshrl.u32 %v47, 7
    %v49 = vsub.s32 0, %v48
    %v50 = vrot.slane %v45, %v49
    %52 = vmatprep.subr.mxu0 0.0
    %53 = vmatpush1.msra.mxu0 %v29
    %54 = vmatprep.subr.mxu0 0.0
    %55 = vmatpush1.msra.mxu0 %v30
    %56 = vmatprep.subr.mxu0 0.0
    %57 = vmatpush1.msra.mxu0 %v31
    %58 = vmatprep.subr.mxu0 0.0
    %59 = vmatpush1.msra.mxu0 %v32
    %60 = vmatprep.subr.mxu0 0.0
    %61 = vmatpush1.msra.mxu0 %v33
    %62 = vmatprep.subr.mxu0 0.0
    %63 = vmatpush1.msra.mxu0 %v34
    %64 = vmatprep.subr.mxu0 0.0
    %65 = vmatpush1.msra.mxu0 %v35
    %66 = vmatprep.subr.mxu0 0.0
    %67 = vmatpush1.msra.mxu0 %v36
    %68 = vmatprep.subr.mxu0 0.0
    %69 = vmatpush1.msra.mxu0 %v37
    %70 = vmatprep.subr.mxu0 0.0
    %71 = vmatpush1.msra.mxu0 %v38
    %72 = vmatprep.subr.mxu0 0.0
    %73 = vmatpush1.msra.mxu0 %v39
    %74 = vmatprep.subr.mxu0 0.0
    %75 = vmatpush1.msra.mxu0 %v40
    %76 = vmatprep.subr.mxu0 0.0
    %77 = vmatpush1.msra.mxu0 %v41
    %78 = vmatprep.subr.mxu0 0.0
    %79 = vmatpush1.msra.mxu0 %v42
    %80 = vmatprep.subr.mxu0 0.0
    %81 = vmatpush1.msra.mxu0 %v43
    %82 = vmatprep.subr.mxu0 0.0
    %83 = vmatpush1.msra.mxu0 %v44
    %84 = vmatprep.subr.mxu0 0.0
    %85 = vmatpush1.msra.mxu0 0.0
    %86 = vmatprep.subr.mxu0 0.0
    %87 = vmatpush1.msra.mxu0 0.0
    %88 = vmatprep.subr.mxu0 0.0
    %89 = vmatpush1.msra.mxu0 0.0
    %90 = vmatprep.subr.mxu0 0.0
    %91 = vmatpush1.msra.mxu0 0.0
    %92 = vmatprep.subr.mxu0 0.0
    %93 = vmatpush1.msra.mxu0 0.0
    %94 = vmatprep.subr.mxu0 0.0
    %95 = vmatpush1.msra.mxu0 0.0
    %96 = vmatprep.subr.mxu0 0.0
    %97 = vmatpush1.msra.mxu0 0.0
    %98 = vmatprep.subr.mxu0 0.0
    %99 = vmatpush1.msra.mxu0 0.0
    %100 = vmatprep.subr.mxu0 0.0
    %101 = vmatpush1.msra.mxu0 0.0
    %102 = vmatprep.subr.mxu0 0.0
    %103 = vmatpush1.msra.mxu0 0.0
    %104 = vmatprep.subr.mxu0 0.0
    %105 = vmatpush1.msra.mxu0 0.0
    %106 = vmatprep.subr.mxu0 0.0
    %107 = vmatpush1.msra.mxu0 0.0
    %108 = vmatprep.subr.mxu0 0.0
    %109 = vmatpush1.msra.mxu0 0.0
    %110 = vmatprep.subr.mxu0 0.0
    %111 = vmatpush1.msra.mxu0 0.0
    %112 = vmatprep.subr.mxu0 0.0
    %113 = vmatpush1.msra.mxu0 0.0
    %114 = vmatprep.subr.mxu0 0.0
    %115 = vmatpush1.msra.mxu0 0.0
    %116 = vmatprep.mubr.f32.mxu0 0.0
    %117 = vmatmul.mubr.f32.gmra.mrb[0].mxu0 %v28
    %v118 = vpop.f32.mrb[0].mxu0
    %v119 = vadd.f32 %v50, %v118
    %v120 = vpop.f32.mrb[0].mxu0
    %121 = vdwg.mxu0
    %v122 = vmax.f32 %v119, 0.0
    %s123 = scalar_lea.vmem [#allocation2], 128
    %v124 = vld [vmem:[%s123] sm:$0xff]
    %v125 = vld [vmem:[%s123 + $0x8] sm:$0xff]
    %v126 = vld [vmem:[%s123 + $0x10] sm:$0xff]
    %v127 = vld [vmem:[%s123 + $0x18] sm:$0xff]
    %v128 = vld [vmem:[%s123 + $0x20] sm:$0xff]
    %v129 = vld [vmem:[%s123 + $0x28] sm:$0xff]
    %v130 = vld [vmem:[%s123 + $0x30] sm:$0xff]
    %v131 = vld [vmem:[%s123 + $0x38] sm:$0xff]
    %v132 = vld [vmem:[%s123 + $0x40] sm:$0xff]
    %v133 = vld [vmem:[%s123 + $0x48] sm:$0xff]
    %v134 = vld [vmem:[%s123 + $0x50] sm:$0xff]
    %v135 = vld [vmem:[%s123 + $0x58] sm:$0xff]
    %v136 = vld [vmem:[%s123 + $0x60] sm:$0xff]
    %v137 = vld [vmem:[%s123 + $0x68] sm:$0xff]
    %v138 = vld [vmem:[%s123 + $0x70] sm:$0xff]
    %v139 = vld [vmem:[%s123 + $0x78] sm:$0xff]
    %s140 = scalar_lea.vmem %s2, 1
    %v141 = vld [vmem:[%s140] sm:$0x1]
    %v143 = vlaneseq
    %v144 = vshrl.u32 %v143, 7
    %v145 = vsub.s32 0, %v144
    %v146 = vrot.slane %v141, %v145
    %148 = vmatprep.subr.mxu0 0.0
    %149 = vmatpush1.msra.mxu0 %v124
    %150 = vmatprep.subr.mxu0 0.0
    %151 = vmatpush1.msra.mxu0 %v125
    %152 = vmatprep.subr.mxu0 0.0
    %153 = vmatpush1.msra.mxu0 %v126
    %154 = vmatprep.subr.mxu0 0.0
    %155 = vmatpush1.msra.mxu0 %v127
    %156 = vmatprep.subr.mxu0 0.0
    %157 = vmatpush1.msra.mxu0 %v128
    %158 = vmatprep.subr.mxu0 0.0
    %159 = vmatpush1.msra.mxu0 %v129
    %160 = vmatprep.subr.mxu0 0.0
    %161 = vmatpush1.msra.mxu0 %v130
    %162 = vmatprep.subr.mxu0 0.0
    %163 = vmatpush1.msra.mxu0 %v131
    %164 = vmatprep.subr.mxu0 0.0
    %165 = vmatpush1.msra.mxu0 %v132
    %166 = vmatprep.subr.mxu0 0.0
    %167 = vmatpush1.msra.mxu0 %v133
    %168 = vmatprep.subr.mxu0 0.0
    %169 = vmatpush1.msra.mxu0 %v134
    %170 = vmatprep.subr.mxu0 0.0
    %171 = vmatpush1.msra.mxu0 %v135
    %172 = vmatprep.subr.mxu0 0.0
    %173 = vmatpush1.msra.mxu0 %v136
    %174 = vmatprep.subr.mxu0 0.0
    %175 = vmatpush1.msra.mxu0 %v137
    %176 = vmatprep.subr.mxu0 0.0
    %177 = vmatpush1.msra.mxu0 %v138
    %178 = vmatprep.subr.mxu0 0.0
    %179 = vmatpush1.msra.mxu0 %v139
    %180 = vmatprep.subr.mxu0 0.0
    %181 = vmatpush1.msra.mxu0 0.0
    %182 = vmatprep.subr.mxu0 0.0
    %183 = vmatpush1.msra.mxu0 0.0
    %184 = vmatprep.subr.mxu0 0.0
    %185 = vmatpush1.msra.mxu0 0.0
    %186 = vmatprep.subr.mxu0 0.0
    %187 = vmatpush1.msra.mxu0 0.0
    %188 = vmatprep.subr.mxu0 0.0
    %189 = vmatpush1.msra.mxu0 0.0
    %190 = vmatprep.subr.mxu0 0.0
    %191 = vmatpush1.msra.mxu0 0.0
    %192 = vmatprep.subr.mxu0 0.0
    %193 = vmatpush1.msra.mxu0 0.0
    %194 = vmatprep.subr.mxu0 0.0
    %195 = vmatpush1.msra.mxu0 0.0
    %196 = vmatprep.subr.mxu0 0.0
    %197 = vmatpush1.msra.mxu0 0.0
    %198 = vmatprep.subr.mxu0 0.0
    %199 = vmatpush1.msra.mxu0 0.0
    %200 = vmatprep.subr.mxu0 0.0
    %201 = vmatpush1.msra.mxu0 0.0
    %202 = vmatprep.subr.mxu0 0.0
    %203 = vmatpush1.msra.mxu0 0.0
    %204 = vmatprep.subr.mxu0 0.0
    %205 = vmatpush1.msra.mxu0 0.0
    %206 = vmatprep.subr.mxu0 0.0
    %207 = vmatpush1.msra.mxu0 0.0
    %208 = vmatprep.subr.mxu0 0.0
    %209 = vmatpush1.msra.mxu0 0.0
    %210 = vmatprep.subr.mxu0 0.0
    %211 = vmatpush1.msra.mxu0 0.0
    %212 = vmatprep.mubr.f32.mxu0 0.0
    %213 = vmatmul.mubr.f32.gmra.mrb[0].mxu0 %v122
    %v214 = vpop.f32.mrb[0].mxu0
    %v215 = vadd.f32 %v146, %v214
    %v216 = vpop.f32.mrb[0].mxu0
    %217 = vdwg.mxu0
    %v218 = vmax.f32 %v215, 0.0
    %s219 = scalar_lea.vmem [#allocation2], 256
    %v220 = vld [vmem:[%s219] sm:$0xff]
    %v221 = vld [vmem:[%s219 + $0x8] sm:$0xff]
    %v222 = vld [vmem:[%s219 + $0x10] sm:$0xff]
    %v223 = vld [vmem:[%s219 + $0x18] sm:$0xff]
    %v224 = vld [vmem:[%s219 + $0x20] sm:$0xff]
    %v225 = vld [vmem:[%s219 + $0x28] sm:$0xff]
    %v226 = vld [vmem:[%s219 + $0x30] sm:$0xff]
    %v227 = vld [vmem:[%s219 + $0x38] sm:$0xff]
    %v228 = vld [vmem:[%s219 + $0x40] sm:$0xff]
    %v229 = vld [vmem:[%s219 + $0x48] sm:$0xff]
    %v230 = vld [vmem:[%s219 + $0x50] sm:$0xff]
    %v231 = vld [vmem:[%s219 + $0x58] sm:$0xff]
    %v232 = vld [vmem:[%s219 + $0x60] sm:$0xff]
    %v233 = vld [vmem:[%s219 + $0x68] sm:$0xff]
    %v234 = vld [vmem:[%s219 + $0x70] sm:$0xff]
    %v235 = vld [vmem:[%s219 + $0x78] sm:$0xff]
    %s236 = scalar_lea.vmem %s2, 2
    %v237 = vld [vmem:[%s236] sm:$0x1]
    %v239 = vlaneseq
    %v240 = vshrl.u32 %v239, 7
    %v241 = vsub.s32 0, %v240
    %v242 = vrot.slane %v237, %v241
    %244 = vmatprep.subr.mxu0 0.0
    %245 = vmatpush1.msra.mxu0 %v220
    %246 = vmatprep.subr.mxu0 0.0
    %247 = vmatpush1.msra.mxu0 %v221
    %248 = vmatprep.subr.mxu0 0.0
    %249 = vmatpush1.msra.mxu0 %v222
    %250 = vmatprep.subr.mxu0 0.0
    %251 = vmatpush1.msra.mxu0 %v223
    %252 = vmatprep.subr.mxu0 0.0
    %253 = vmatpush1.msra.mxu0 %v224
    %254 = vmatprep.subr.mxu0 0.0
    %255 = vmatpush1.msra.mxu0 %v225
    %256 = vmatprep.subr.mxu0 0.0
    %257 = vmatpush1.msra.mxu0 %v226
    %258 = vmatprep.subr.mxu0 0.0
    %259 = vmatpush1.msra.mxu0 %v227
    %260 = vmatprep.subr.mxu0 0.0
    %261 = vmatpush1.msra.mxu0 %v228
    %262 = vmatprep.subr.mxu0 0.0
    %263 = vmatpush1.msra.mxu0 %v229
    %264 = vmatprep.subr.mxu0 0.0
    %265 = vmatpush1.msra.mxu0 %v230
    %266 = vmatprep.subr.mxu0 0.0
    %267 = vmatpush1.msra.mxu0 %v231
    %268 = vmatprep.subr.mxu0 0.0
    %269 = vmatpush1.msra.mxu0 %v232
    %270 = vmatprep.subr.mxu0 0.0
    %271 = vmatpush1.msra.mxu0 %v233
    %272 = vmatprep.subr.mxu0 0.0
    %273 = vmatpush1.msra.mxu0 %v234
    %274 = vmatprep.subr.mxu0 0.0
    %275 = vmatpush1.msra.mxu0 %v235
    %276 = vmatprep.subr.mxu0 0.0
    %277 = vmatpush1.msra.mxu0 0.0
    %278 = vmatprep.subr.mxu0 0.0
    %279 = vmatpush1.msra.mxu0 0.0
    %280 = vmatprep.subr.mxu0 0.0
    %281 = vmatpush1.msra.mxu0 0.0
    %282 = vmatprep.subr.mxu0 0.0
    %283 = vmatpush1.msra.mxu0 0.0
    %284 = vmatprep.subr.mxu0 0.0
    %285 = vmatpush1.msra.mxu0 0.0
    %286 = vmatprep.subr.mxu0 0.0
    %287 = vmatpush1.msra.mxu0 0.0
    %288 = vmatprep.subr.mxu0 0.0
    %289 = vmatpush1.msra.mxu0 0.0
    %290 = vmatprep.subr.mxu0 0.0
    %291 = vmatpush1.msra.mxu0 0.0
    %292 = vmatprep.subr.mxu0 0.0
    %293 = vmatpush1.msra.mxu0 0.0
    %294 = vmatprep.subr.mxu0 0.0
    %295 = vmatpush1.msra.mxu0 0.0
    %296 = vmatprep.subr.mxu0 0.0
    %297 = vmatpush1.msra.mxu0 0.0
    %298 = vmatprep.subr.mxu0 0.0
    %299 = vmatpush1.msra.mxu0 0.0
    %300 = vmatprep.subr.mxu0 0.0
    %301 = vmatpush1.msra.mxu0 0.0
    %302 = vmatprep.subr.mxu0 0.0
    %303 = vmatpush1.msra.mxu0 0.0
    %304 = vmatprep.subr.mxu0 0.0
    %305 = vmatpush1.msra.mxu0 0.0
    %306 = vmatprep.subr.mxu0 0.0
    %307 = vmatpush1.msra.mxu0 0.0
    %308 = vmatprep.mubr.f32.mxu0 0.0
    %309 = vmatmul.mubr.f32.gmra.mrb[0].mxu0 %v218
    %v310 = vpop.f32.mrb[0].mxu0
    %v311 = vadd.f32 %v242, %v310
    %v312 = vpop.f32.mrb[0].mxu0
    %313 = vdwg.mxu0
    %v314 = vmax.f32 %v311, 0.0
    %s315 = scalar_lea.vmem [#allocation2], 384
    %v316 = vld [vmem:[%s315] sm:$0xff]
    %v317 = vld [vmem:[%s315 + $0x8] sm:$0xff]
    %v318 = vld [vmem:[%s315 + $0x10] sm:$0xff]
    %v319 = vld [vmem:[%s315 + $0x18] sm:$0xff]
    %v320 = vld [vmem:[%s315 + $0x20] sm:$0xff]
    %v321 = vld [vmem:[%s315 + $0x28] sm:$0xff]
    %v322 = vld [vmem:[%s315 + $0x30] sm:$0xff]
    %v323 = vld [vmem:[%s315 + $0x38] sm:$0xff]
    %v324 = vld [vmem:[%s315 + $0x40] sm:$0xff]
    %v325 = vld [vmem:[%s315 + $0x48] sm:$0xff]
    %v326 = vld [vmem:[%s315 + $0x50] sm:$0xff]
    %v327 = vld [vmem:[%s315 + $0x58] sm:$0xff]
    %v328 = vld [vmem:[%s315 + $0x60] sm:$0xff]
    %v329 = vld [vmem:[%s315 + $0x68] sm:$0xff]
    %v330 = vld [vmem:[%s315 + $0x70] sm:$0xff]
    %v331 = vld [vmem:[%s315 + $0x78] sm:$0xff]
    %s332 = scalar_lea.vmem %s2, 3
    %v333 = vld [vmem:[%s332] sm:$0x1]
    %v335 = vlaneseq
    %v336 = vshrl.u32 %v335, 7
    %v337 = vsub.s32 0, %v336
    %v338 = vrot.slane %v333, %v337
    %340 = vmatprep.subr.mxu0 0.0
    %341 = vmatpush1.msra.mxu0 %v316
    %342 = vmatprep.subr.mxu0 0.0
    %343 = vmatpush1.msra.mxu0 %v317
    %344 = vmatprep.subr.mxu0 0.0
    %345 = vmatpush1.msra.mxu0 %v318
    %346 = vmatprep.subr.mxu0 0.0
    %347 = vmatpush1.msra.mxu0 %v319
    %348 = vmatprep.subr.mxu0 0.0
    %349 = vmatpush1.msra.mxu0 %v320
    %350 = vmatprep.subr.mxu0 0.0
    %351 = vmatpush1.msra.mxu0 %v321
    %352 = vmatprep.subr.mxu0 0.0
    %353 = vmatpush1.msra.mxu0 %v322
    %354 = vmatprep.subr.mxu0 0.0
    %355 = vmatpush1.msra.mxu0 %v323
    %356 = vmatprep.subr.mxu0 0.0
    %357 = vmatpush1.msra.mxu0 %v324
    %358 = vmatprep.subr.mxu0 0.0
    %359 = vmatpush1.msra.mxu0 %v325
    %360 = vmatprep.subr.mxu0 0.0
    %361 = vmatpush1.msra.mxu0 %v326
    %362 = vmatprep.subr.mxu0 0.0
    %363 = vmatpush1.msra.mxu0 %v327
    %364 = vmatprep.subr.mxu0 0.0
    %365 = vmatpush1.msra.mxu0 %v328
    %366 = vmatprep.subr.mxu0 0.0
    %367 = vmatpush1.msra.mxu0 %v329
    %368 = vmatprep.subr.mxu0 0.0
    %369 = vmatpush1.msra.mxu0 %v330
    %370 = vmatprep.subr.mxu0 0.0
    %371 = vmatpush1.msra.mxu0 %v331
    %372 = vmatprep.subr.mxu0 0.0
    %373 = vmatpush1.msra.mxu0 0.0
    %374 = vmatprep.subr.mxu0 0.0
    %375 = vmatpush1.msra.mxu0 0.0
    %376 = vmatprep.subr.mxu0 0.0
    %377 = vmatpush1.msra.mxu0 0.0
    %378 = vmatprep.subr.mxu0 0.0
    %379 = vmatpush1.msra.mxu0 0.0
    %380 = vmatprep.subr.mxu0 0.0
    %381 = vmatpush1.msra.mxu0 0.0
    %382 = vmatprep.subr.mxu0 0.0
    %383 = vmatpush1.msra.mxu0 0.0
    %384 = vmatprep.subr.mxu0 0.0
    %385 = vmatpush1.msra.mxu0 0.0
    %386 = vmatprep.subr.mxu0 0.0
    %387 = vmatpush1.msra.mxu0 0.0
    %388 = vmatprep.subr.mxu0 0.0
    %389 = vmatpush1.msra.mxu0 0.0
    %390 = vmatprep.subr.mxu0 0.0
    %391 = vmatpush1.msra.mxu0 0.0
    %392 = vmatprep.subr.mxu0 0.0
    %393 = vmatpush1.msra.mxu0 0.0
    %394 = vmatprep.subr.mxu0 0.0
    %395 = vmatpush1.msra.mxu0 0.0
    %396 = vmatprep.subr.mxu0 0.0
    %397 = vmatpush1.msra.mxu0 0.0
    %398 = vmatprep.subr.mxu0 0.0
    %399 = vmatpush1.msra.mxu0 0.0
    %400 = vmatprep.subr.mxu0 0.0
    %401 = vmatpush1.msra.mxu0 0.0
    %402 = vmatprep.subr.mxu0 0.0
    %403 = vmatpush1.msra.mxu0 0.0
    %404 = vmatprep.mubr.f32.mxu0 0.0
    %405 = vmatmul.mubr.f32.gmra.mrb[0].mxu0 %v314
    %v406 = vpop.f32.mrb[0].mxu0
    %v407 = vadd.f32 %v338, %v406
    %v408 = vpop.f32.mrb[0].mxu0
    %409 = vdwg.mxu0
    %v410 = vlaneseq
    %v411 = vand.u32 %v410, 127
    %v412 = vlaneseq
    %v413 = vshrl.u32 %v412, 7
    %s414 = smul.u32 0, 8
    %v415 = vstv %s414
    %v416 = vadd.s32 %v413, %v415
    %vm417 = vcmp.lt.s32.totalorder %v416, 8
    %vm418 = vcmp.lt.s32.totalorder %v411, 8
    %v419 = vsel %vm418, 1, 0
    %vm420 = vcmp.eq.s32.totalorder %v419, 1
    %v421 = vsel %vm417, 1, 0
    %vm422 = vcmp.eq.s32.totalorder %v421, 1
    %vm423 = vmand %vm420, %vm422
    %v424 = vsel %vm423, %v407, 0.0
    %425 = vadd.xlane.f32.xlu0 %v424
    %v426 = vpop.xlane.xlu0 %425
    %vm427 = vcmp.eq.s32.totalorder %v411, 8
    %v428 = vsel %vm427, 1, 0
    %vm429 = vcmp.eq.s32.totalorder %v428, 1
    %v430 = vsel %vm429, %v407, 0.0
    %431 = vadd.xlane.f32.xlu0 %v430
    %v432 = vpop.xlane.xlu0 %431
    %v433 = vadd.f32 %v432, %v407
    %v434 = vsel %vm429, %v426, %v433
    %435 = vst [vmem:[%s3] sm:$0xff] %v434
    // Predicated region
    $region18: #{dueling_dqn_forward.1} parent=1 // pred_check
      _
    $region19: #{dueling_dqn_forward.1} parent=1 // pred_check_branch
      %437 = sbr.rel (0) target = $region21
    $region20: #{dueling_dqn_forward.1} parent=1 // pred_region
      _
    $region21: #{dueling_dqn_forward.1} parent=1 // pred_fallthru
      _
    // Predicated region
    $region22: #{dueling_dqn_forward.1} parent=1 // pred_check
      _
    $region23: #{dueling_dqn_forward.1} parent=1 // pred_check_branch
      %439 = sbr.rel (0) target = $region25
    $region24: #{dueling_dqn_forward.1} parent=1 // pred_region
      _
    $region25: #{dueling_dqn_forward.1} parent=1 // pred_fallthru
      _
    %440 = vsyncpa [#allocation3], 1

</llo_original>
